<compile_context>
chip_gen: v7x
topology: tpu7x:2x2x1
jax: 0.10.0
libtpu: 0.0.40
codegen_flags: <defaults>
</compile_context>

<pallas_src>
import jax
import jax.numpy as jnp
from jax.experimental import pallas as pl
from jax.experimental.pallas import tpu as pltpu


def _reasoning_kernel(logw_ref, sym_ref, probs_ref):
    """Fused data-dependent part of ReasoningAgent.forward.

    S = num_symptoms, D = num_diseases, BP = broadcast(batch, D).
      logw_ref : [D, S, S]  log(softmax(sim) * sigmoid(rule_mask)) for
                            (disease d, rule s, predicate k); parameter-only,
                            precomputed once at construction time.
      sym_ref  : [B, 1, S]  symptom observations (0/1 floats), broadcast here.
      probs_ref: [BP, 1]    disease probabilities.
    """
    log_w = logw_ref[...]                                      # [D, S, S]
    sym = sym_ref[...]                                         # [B, 1, S]

    # prod_k where(v>0, W, 1)  ==  exp(sum_k where(v>0, log W, 0)).
    # log_w is finite (log_softmax + log_sigmoid of f32), but keep the select
    # rather than a 0/1 multiply so an underflowed gate can never become
    # 0 * (-inf) = NaN.
    masked_log = jnp.where(sym > 0.0, log_w, 0.0)              # [BP, S, S]
    rule_scores = jnp.exp(jnp.sum(masked_log, axis=-1))        # [BP, S]

    # disease_scores[bp] = sum_s rule_scores[bp, s]; softmax over diseases.
    disease = jnp.sum(rule_scores, axis=-1, keepdims=True)     # [BP, 1]
    z = disease - jnp.max(disease, axis=0, keepdims=True)
    e = jnp.exp(z)
    # Exact division on purpose: approx vrcp would eat the 1e-4 tolerance.
    probs_ref[...] = e / jnp.sum(e, axis=0, keepdims=True)     # [BP, 1]


class ReasoningAgentPallas:
    """Deterministic JAX/Pallas re-implementation of ReasoningAgent.forward."""

    def __init__(self, num_symptoms, num_diseases, hidden_size,
                 temperature=1.0, key=None):
        assert hidden_size >= num_symptoms + 1
        if key is None:
            key = jax.random.PRNGKey(0)
        k_rule, k_mask = jax.random.split(key)

        self.num_symptoms = num_symptoms
        self.num_diseases = num_diseases
        self.hidden_size = hidden_size
        self.temperature = float(temperature)

        # xavier_uniform init of the rule embedding ([D*S, H]).
        fan_out, fan_in = num_diseases * num_symptoms, hidden_size
        bound = (6.0 / (fan_in + fan_out)) ** 0.5
        self.rule_emb = jax.random.uniform(
            k_rule, (num_diseases * num_symptoms, hidden_size),
            dtype=jnp.float32, minval=-bound, maxval=bound)

        # rule_mask ~ N(0, 1)
        self.rule_mask = jax.random.normal(
            k_mask, (num_diseases, num_symptoms), dtype=jnp.float32)

        # ---- one-time, parameter-only preprocessing (hoisted out of kernel) --
        D, S = num_diseases, num_symptoms
        # predicate_embedding is identity rows => rule_emb @ pred_emb.T == rule_emb[:, :S]
        sim = self.rule_emb[:, :S] / self.temperature                 # [D*S, S]
        log_w = jax.nn.log_softmax(sim, axis=-1).reshape(D, S, S)     # [D, S, S]
        log_sel = jax.nn.log_sigmoid(self.rule_mask)                  # [D, S]
        self._log_w3 = (log_w + log_sel[:, :, None]).astype(jnp.float32)
        # rule_weights is parameter-only; it never enters the kernel.
        self._rule_weights = jax.nn.sigmoid(self.rule_mask).mean(axis=-1)

    def __call__(self, masked_symptoms):
        B = masked_symptoms.shape[0]
        D, S = self.num_diseases, self.num_symptoms
        # torch.where broadcasts [B,1,S] against [D,S,S]; same constraint here
        # (B == D, B == 1 or D == 1).  The broadcast happens INSIDE the kernel.
        (BP,) = jnp.broadcast_shapes((B,), (D,))

        # Metadata-only reshape (no HBM expansion); kernel broadcasts it.
        sym3 = masked_symptoms.astype(jnp.float32)[:, None, :]       # [B, 1, S]

        vmem = pl.BlockSpec(memory_space=pltpu.MemorySpace.VMEM)
        probs_col = pl.pallas_call(
            _reasoning_kernel,
            out_shape=jax.ShapeDtypeStruct((BP, 1), jnp.float32),
            in_specs=[vmem, vmem],
            out_specs=vmem,
        )(self._log_w3, sym3)

        # Glue matching torch's unsqueeze(0).expand(batch, -1).
        disease_probs = jnp.broadcast_to(probs_col.reshape(1, BP), (B, BP))
        return disease_probs, self._rule_weights


def _reference(agent, masked_symptoms):
    """Pure-JAX reference matching the PyTorch semantics exactly."""
    D, S, H = agent.num_diseases, agent.num_symptoms, agent.hidden_size
    B = masked_symptoms.shape[0]
    pred_emb = jnp.eye(H, dtype=jnp.float32)[:S]
    sim = (agent.rule_emb @ pred_emb.T) / agent.temperature
    W = jax.nn.softmax(sim, axis=1).reshape(D, S, S)
    sel = jax.nn.sigmoid(agent.rule_mask)
    rule_weights = sel.mean(axis=-1)
    W = W * sel[:, :, None]
    v = masked_symptoms[:, None, :]
    rule_scores = jnp.prod(jnp.where(v > 0, W, jnp.ones_like(W)), axis=-1)
    disease_scores = jnp.sum(rule_scores, axis=1)
    probs = jax.nn.softmax(disease_scores, axis=0)
    disease_probs = jnp.broadcast_to(probs[None, :], (B, probs.shape[0]))
    return disease_probs, rule_weights


if __name__ == "__main__":
    num_symptoms = 8
    num_diseases = 4
    hidden_size = 32
    temperature = 0.75
    batch_size = 4   # == num_diseases so the torch broadcast in forward() is valid

    root = jax.random.PRNGKey(0)
    k_params, k_sym = jax.random.split(root)

    agent = ReasoningAgentPallas(num_symptoms, num_diseases, hidden_size,
                                 temperature=temperature, key=k_params)

    # Binary symptom observations (0.0 / 1.0), deterministic.
    masked_symptoms = (jax.random.uniform(k_sym, (batch_size, num_symptoms))
                       > 0.5).astype(jnp.float32)

    disease_probs, rule_weights = agent(masked_symptoms)
    disease_probs = jax.block_until_ready(disease_probs)
    rule_weights = jax.block_until_ready(rule_weights)

    ref_probs, ref_weights = _reference(agent, masked_symptoms)
    assert disease_probs.shape == (batch_size, num_diseases)
    assert rule_weights.shape == (num_diseases,)
    assert jnp.allclose(disease_probs, ref_probs, rtol=1e-4, atol=1e-5)
    assert jnp.allclose(rule_weights, ref_weights, rtol=1e-5, atol=1e-6)

    print("KERNEL_OK")
</pallas_src>

<mosaic_0001>
module attributes {stable_mosaic.version = 11 : i64} {
  func.func @_reasoning_kernel(%arg0: memref<4x8x8xf32, #tpu.memory_space<vmem>>, %arg1: memref<4x1x8xf32, #tpu.memory_space<vmem>>, %arg2: memref<4x1xf32, #tpu.memory_space<vmem>>) attributes {dimension_semantics = [], scalar_prefetch = 0 : i64, scratch_operands = 0 : i64, tpu.core_type = #tpu.core_type<tc>} {
    %c0 = arith.constant 0 : index
    %c0_0 = arith.constant 0 : index
    %c0_1 = arith.constant 0 : index
    %0 = vector.load %arg0[%c0, %c0_0, %c0_1] : memref<4x8x8xf32, #tpu.memory_space<vmem>>, vector<4x8x8xf32>
    %c0_2 = arith.constant 0 : index
    %c0_3 = arith.constant 0 : index
    %c0_4 = arith.constant 0 : index
    %1 = vector.load %arg1[%c0_2, %c0_3, %c0_4] : memref<4x1x8xf32, #tpu.memory_space<vmem>>, vector<4x1x8xf32>
    %cst = arith.constant 0.000000e+00 : f32
    %2 = vector.broadcast %cst : f32 to vector<4x1x8xf32>
    %3 = arith.cmpf ogt, %1, %2 : vector<4x1x8xf32>
    %cst_5 = arith.constant 0.000000e+00 : f32
    %4 = vector.shape_cast %3 : vector<4x1x8xi1> to vector<4x1x8xi1>
    %5 = vector.broadcast %4 : vector<4x1x8xi1> to vector<4x8x8xi1>
    %6 = vector.broadcast %cst_5 : f32 to vector<4x8x8xf32>
    %7 = arith.select %5, %0, %6 : vector<4x8x8xi1>, vector<4x8x8xf32>
    %cst_6 = arith.constant dense<0.000000e+00> : vector<4x8xf32>
    %8 = vector.multi_reduction <add>, %7, %cst_6 [2] : vector<4x8x8xf32> to vector<4x8xf32>
    %9 = math.exp %8 : vector<4x8xf32>
    %cst_7 = arith.constant dense<0.000000e+00> : vector<4xf32>
    %10 = vector.multi_reduction <add>, %9, %cst_7 [1] : vector<4x8xf32> to vector<4xf32>
    %11 = vector.shape_cast %10 : vector<4xf32> to vector<4x1xf32>
    %cst_8 = arith.constant dense<0xFF800000> : vector<1xf32>
    %12 = vector.multi_reduction <maximumf>, %11, %cst_8 [0] : vector<4x1xf32> to vector<1xf32>
    %13 = vector.shape_cast %12 : vector<1xf32> to vector<1x1xf32>
    %14 = vector.broadcast %13 : vector<1x1xf32> to vector<4x1xf32>
    %15 = arith.subf %11, %14 : vector<4x1xf32>
    %16 = math.exp %15 : vector<4x1xf32>
    %cst_9 = arith.constant dense<0.000000e+00> : vector<1xf32>
    %17 = vector.multi_reduction <add>, %16, %cst_9 [0] : vector<4x1xf32> to vector<1xf32>
    %18 = vector.shape_cast %17 : vector<1xf32> to vector<1x1xf32>
    %19 = vector.broadcast %18 : vector<1x1xf32> to vector<4x1xf32>
    %20 = arith.divf %16, %19 : vector<4x1xf32>
    %c0_10 = arith.constant 0 : index
    %c0_11 = arith.constant 0 : index
    %21 = vector.load %arg2[%c0_10, %c0_11] : memref<4x1xf32, #tpu.memory_space<vmem>>, vector<4x1xf32>
    tpu.vector_store %arg2[%c0_10, %c0_11], %20 {strides = array<i32>} : memref<4x1xf32, #tpu.memory_space<vmem>>, vector<4x1xf32>,
    return
  }
}

</mosaic_0001>

<llo_original>
// kernel: tpu_custom_call.1
$region0: #{tpu_custom_call.1}
  #allocation0 [shape = 'u32[]', space=smem, size = 0x4, offset = 0x4, fixed_abs, tag = 'smem constant byte address 0x4 - core index']
  #allocation1 [shape = 'u32[144,128]{1,0:T(1,128)}', space=vmem, size = 0x12000, scoped, tag = 'internal scratch']
  %s0 = inlined_call_operand.hbm [shape: f32[4,8,8], index: 0, kind: input, shape index: {}]
  %s1 = inlined_call_operand.hbm [shape: f32[4,1,8], index: 1, kind: input, shape index: {}]
  %s2 = inlined_call_operand.vmem [shape: f32[4,1], index: 2, kind: output, shape index: {}]
  %s3 = sld [smem:[#allocation0]]
  $region26: #{tpu_custom_call.1} parent=0
    _
  %s5 = ssub.s32 1, %s3
  %s6 = scalar_select 0, %s5, %s3
  $region1: #{tpu_custom_call.1} parent=0
    #allocation2 [shape = 'u8[16384]{0}', space=vmem, size = 0x4000, scoped, tag = 'input window, operand 0, single buffered']
    #allocation3 [shape = 's32[1]{0}', space=sflag, size = 0x4, scoped, tag = 'scoped memory for tpu_custom_call.1']
    #allocation4 [shape = 'u8[2048]{0}', space=vmem, size = 0x800, scoped, tag = 'input window, operand 1, single buffered']
    #allocation5 [shape = 's32[1]{0}', space=sflag, size = 0x4, scoped, tag = 'scoped memory for tpu_custom_call.1']
    %7 = vsyncpa [#allocation3], 0
    %8 = vsyncpa [#allocation5], 0
    // Predicated region
    $region2: #{tpu_custom_call.1} parent=1 // pred_check
      _
    $region3: #{tpu_custom_call.1} parent=1 // pred_check_branch
      %10 = sbr.rel (0) target = $region5
    $region4: #{tpu_custom_call.1} parent=1 // pred_region
      %s12 = ssub.s32 512, 512
      %13 = vsyncadd [#allocation3], %s12
      %s14 = sshll.u32 [#allocation2], 4
      %s15 = int_to_ptr.vmem [resolvable:$true] %s14
      %20 = dma.hbm_to_vmem [thread:$0]  %s0, 512, %s15, [#allocation3], 128, 128, 8
    $region5: #{tpu_custom_call.1} parent=1 // pred_fallthru
      _
    // Predicated region
    $region6: #{tpu_custom_call.1} parent=1 // pred_check
      _
    $region7: #{tpu_custom_call.1} parent=1 // pred_check_branch
      %22 = sbr.rel (0) target = $region9
    $region8: #{tpu_custom_call.1} parent=1 // pred_region
      %s24 = ssub.s32 64, 64
      %25 = vsyncadd [#allocation5], %s24
      %s26 = sshll.u32 [#allocation4], 4
      %s27 = int_to_ptr.vmem [resolvable:$true] %s26
      %32 = dma.hbm_to_vmem [thread:$0]  %s1, 64, %s27, [#allocation5], 16, 16, 1
    $region9: #{tpu_custom_call.1} parent=1 // pred_fallthru
      _
    // Predicated region
    $region10: #{tpu_custom_call.1} parent=1 // pred_check
      _
    $region11: #{tpu_custom_call.1} parent=1 // pred_check_branch
      %34 = sbr.rel (0) target = $region13
    $region12: #{tpu_custom_call.1} parent=1 // pred_region
      %35 = dma.done [#allocation3], 512
    $region13: #{tpu_custom_call.1} parent=1 // pred_fallthru
      _
    // Predicated region
    $region14: #{tpu_custom_call.1} parent=1 // pred_check
      _
    $region15: #{tpu_custom_call.1} parent=1 // pred_check_branch
      %37 = sbr.rel (0) target = $region17
    $region16: #{tpu_custom_call.1} parent=1 // pred_region
      %38 = dma.done [#allocation5], 64
    $region17: #{tpu_custom_call.1} parent=1 // pred_fallthru
      _
    %v39 = vld [vmem:[#allocation2] sm:$0xff]
    %v40 = vld [vmem:[#allocation2 + $0x8] sm:$0xff]
    %v41 = vld [vmem:[#allocation2 + $0x10] sm:$0xff]
    %v42 = vld [vmem:[#allocation2 + $0x18] sm:$0xff]
    %v43 = vld [vmem:[#allocation4] sm:$0x1]
    %v44 = vld [vmem:[#allocation4 + $0x1] sm:$0x1]
    %v45 = vld [vmem:[#allocation4 + $0x2] sm:$0x1]
    %v46 = vld [vmem:[#allocation4 + $0x3] sm:$0x1]
    %vm47 = vcmp.gt.f32.partialorder %v43, 0.0
    %vm48 = vcmp.gt.f32.partialorder %v44, 0.0
    %vm49 = vcmp.gt.f32.partialorder %v45, 0.0
    %vm50 = vcmp.gt.f32.partialorder %v46, 0.0
    %v51 = vsel %vm47, 1, 0
    %v52 = vsel %vm48, 1, 0
    %v53 = vsel %vm49, 1, 0
    %v54 = vsel %vm50, 1, 0
    %v55 = vlaneseq
    %v56 = vshrl.u32 %v55, 7
    %v57 = vsub.s32 0, %v56
    %v58 = vrot.slane %v51, %v57
    %v59 = vlaneseq
    %v60 = vshrl.u32 %v59, 7
    %v61 = vsub.s32 0, %v60
    %v62 = vrot.slane %v52, %v61
    %v63 = vlaneseq
    %v64 = vshrl.u32 %v63, 7
    %v65 = vsub.s32 0, %v64
    %v66 = vrot.slane %v53, %v65
    %v67 = vlaneseq
    %v68 = vshrl.u32 %v67, 7
    %v69 = vsub.s32 0, %v68
    %v70 = vrot.slane %v54, %v69
    %vm71 = vcmp.eq.s32.totalorder %v58, 1
    %vm72 = vcmp.eq.s32.totalorder %v62, 1
    %vm73 = vcmp.eq.s32.totalorder %v66, 1
    %vm74 = vcmp.eq.s32.totalorder %v70, 1
    %v75 = vsel %vm71, %v39, 0.0
    %v76 = vsel %vm72, %v40, 0.0
    %v77 = vsel %vm73, %v41, 0.0
    %v78 = vsel %vm74, %v42, 0.0
    %vm79 = vcmask 64512
    %v80 = vsel %vm79, %v75, 0.0
    %81 = vadd.xlane.f32.xlu0 %v80
    %v82 = vpop.xlane.xlu0 %81
    %v83 = vsel %vm79, %v76, 0.0
    %84 = vadd.xlane.f32.xlu0 %v83
    %v85 = vpop.xlane.xlu0 %84
    %v86 = vsel %vm79, %v77, 0.0
    %87 = vadd.xlane.f32.xlu0 %v86
    %v88 = vpop.xlane.xlu0 %87
    %v89 = vsel %vm79, %v78, 0.0
    %90 = vadd.xlane.f32.xlu0 %v89
    %v91 = vpop.xlane.xlu0 %90
    %v92 = vmul.f32 %v82, 1.442695
    %v93 = vpow.pop %v92
    %v94 = vmul.f32 %v85, 1.442695
    %v95 = vpow.pop %v94
    %v96 = vmul.f32 %v88, 1.442695
    %v97 = vpow.pop %v96
    %v98 = vmul.f32 %v91, 1.442695
    %v99 = vpow.pop %v98
    %v104 = vlaneseq
    %v105 = vand.u32 %v104, 127
    %v106 = vlaneseq
    %v107 = vshrl.u32 %v106, 7
    %v108 = vsub.s32 %v105, %v107
    %v109 = vrot.slane %v93, %v108
    %v110 = vlaneseq
    %v111 = vshrl.u32 %v110, 7
    %v112 = vsub.s32 %v105, %v111
    %v113 = vrot.slane %v95, %v112
    %v114 = vlaneseq
    %v115 = vshrl.u32 %v114, 7
    %v116 = vsub.s32 %v105, %v115
    %v117 = vrot.slane %v97, %v116
    %v118 = vlaneseq
    %v119 = vshrl.u32 %v118, 7
    %v120 = vsub.s32 %v105, %v119
    %v121 = vrot.slane %v99, %v120
    %vm122 = vcmask 1041409
    %v123 = vsel %vm122, %v113, %v109
    %vm124 = vcmask 1042434
    %v125 = vsel %vm124, %v117, %v123
    %vm126 = vcmask 1043459
    %v127 = vsel %vm126, %v121, %v125
    %vm129 = vcmask 60416
    %v130 = vsel %vm129, %v127, 0.0
    %131 = vadd.xlane.f32.xlu0 %v130
    %v132 = vpop.xlane.xlu0 %131
    %vm133 = vcmask 1043456
    %v134 = vsel %vm133, %v132, -inf
    %v135 = vrot.slane %v134, 4
    %v136 = vmax.f32 %v134, %v135
    %v137 = vrot.slane %v136, 2
    %v138 = vmax.f32 %v136, %v137
    %v139 = vrot.slane %v138, 1
    %v140 = vmax.f32 %v138, %v139
    %v141 = vsub.f32 %v132, %v140
    %v142 = vmul.f32 %v141, 1.442695
    %v143 = vpow.pop %v142
    %v144 = vsel %vm133, %v143, 0.0
    %v145 = vrot.slane %v144, 4
    %v146 = vadd.f32 %v144, %v145
    %v147 = vrot.slane %v146, 2
    %v148 = vadd.f32 %v146, %v147
    %v149 = vrot.slane %v148, 1
    %v150 = vadd.f32 %v148, %v149
    %v151 = vrcp.pop %v150
    %v152 = vmul.f32 %v143, %v151
    %vm153 = vcmask 3072
    %154 = vst.msk [vmem:[%s2] sm:$0xf] %vm153, %v152
    // Predicated region
    $region18: #{tpu_custom_call.1} parent=1 // pred_check
      _
    $region19: #{tpu_custom_call.1} parent=1 // pred_check_branch
      %156 = sbr.rel (0) target = $region21
    $region20: #{tpu_custom_call.1} parent=1 // pred_region
      _
    $region21: #{tpu_custom_call.1} parent=1 // pred_fallthru
      _
    // Predicated region
    $region22: #{tpu_custom_call.1} parent=1 // pred_check
      _
    $region23: #{tpu_custom_call.1} parent=1 // pred_check_branch
      %158 = sbr.rel (0) target = $region25
    $region24: #{tpu_custom_call.1} parent=1 // pred_region
      _
    $region25: #{tpu_custom_call.1} parent=1 // pred_fallthru
      _
    %159 = vsyncpa [#allocation3], 1
    %160 = vsyncpa [#allocation5], 1

</llo_original>
